<compile_context>
chip_gen: v7x
topology: tpu7x:2x2x1
jax: 0.10.0
libtpu: 0.0.40
codegen_flags: <defaults>
</compile_context>

<pallas_src>
import jax
import jax.numpy as jnp
from jax import lax
from jax.experimental import pallas as pl
from jax.experimental.pallas import tpu as pltpu


def conv3x3_relu_kernel(patch_ref, w_ref, b_ref, o_ref):
    # patch_ref: (nb, 9*Cin, H*W)  lane-dense patch block (nb = 1 or N)
    # w_ref:     (Cout, 9*Cin)     weights, K ordered (cin, kh, kw)
    # b_ref:     (Cout, 1)         bias column (broadcast along lanes)
    # o_ref:     (nb, Cout, H*W)   lane-dense output, already NCHW per image
    nb = patch_ref.shape[0]
    w = w_ref[...]
    b = b_ref[...]
    for n in range(nb):  # static (1 or 2), unrolled at trace time
        # Single fused MXU matmul: (Cout, 9*Cin) @ (9*Cin, H*W) -> (Cout, H*W).
        acc = jnp.dot(w, patch_ref[n], preferred_element_type=jnp.float32)
        o_ref[n] = jnp.maximum(acc + b, 0.0).astype(o_ref.dtype)


def _tensorcores_per_chip() -> int:
    """Best-effort count of TensorCores behind one JAX TPU device.

    v7x (and v4/v5p megacore) shard `parallel` grid axes across 2 cores;
    v5e/v6e are single-core.  Falls back to 1 (batch folded into one grid
    step), which is correct everywhere and optimal on the single-core chips.
    """
    try:
        info = pltpu.get_tpu_info()
        for attr in ("num_cores", "num_tensorcores", "tensorcores_per_chip",
                     "cores_per_chip", "num_cores_per_chip"):
            v = getattr(info, attr, None)
            if isinstance(v, int) and v >= 1:
                return v
    except Exception:
        pass
    try:
        kind = jax.devices()[0].device_kind.lower()
        if any(tag in kind for tag in ("v7", "v4", "v5p")):
            return 2
    except Exception:
        pass
    return 1


def single_conv_forward(x_nchw, w_oihw, bias):
    """Forward pass of single_conv: Conv2d(3x3, padding=1) + ReLU.

    x_nchw: (N, Cin, H, W)    — PyTorch NCHW convention
    w_oihw: (Cout, Cin, 3, 3) — PyTorch conv weight convention
    bias:   (Cout,)
    returns (N, Cout, H, W)
    """
    N, Cin, H, W = x_nchw.shape
    Cout = w_oihw.shape[0]
    K = 9 * Cin
    HW = H * W

    # Patch matrix built wrapper-side (XLA fuses the pad into the slices).
    # K ordering is (cin, kh, kw): patch[n, c*9 + kh*3 + kw, h*W + w]
    #   = x_pad[n, c, h+kh, w+kw], matching weight.reshape(Cout, Cin*9).
    x_pad = jnp.pad(x_nchw, ((0, 0), (0, 0), (1, 1), (1, 1)))
    taps = [x_pad[:, :, kh:kh + H, kw:kw + W]
            for kh in range(3) for kw in range(3)]            # 9 x (N, Cin, H, W)
    patch = jnp.stack(taps, axis=2).reshape(N, K, HW)          # (N, 9*Cin, H*W)

    w_mat = w_oihw.reshape(Cout, K)                            # (Cout, 9*Cin)
    b_col = bias.reshape(Cout, 1)                              # (Cout, 1)

    if _tensorcores_per_chip() >= 2 and N > 1:
        # Dual-TC (v7x / megacore): one batch element per grid step, sharded
        # across cores via the parallel semantics.
        grid = (N,)
        patch_spec = pl.BlockSpec((1, K, HW), lambda n: (n, 0, 0))
        out_spec = pl.BlockSpec((1, Cout, HW), lambda n: (n, 0, 0))
        semantics = ("parallel",)
    else:
        # Single-TC (v5e / v6e): fold the whole batch into one grid step to
        # avoid paying per-step overhead on a sub-microsecond kernel.
        grid = (1,)
        patch_spec = pl.BlockSpec((N, K, HW), lambda n: (0, 0, 0))
        out_spec = pl.BlockSpec((N, Cout, HW), lambda n: (0, 0, 0))
        semantics = ("arbitrary",)

    out_flat = pl.pallas_call(
        conv3x3_relu_kernel,
        out_shape=jax.ShapeDtypeStruct((N, Cout, HW), x_nchw.dtype),
        grid=grid,
        in_specs=[
            patch_spec,
            pl.BlockSpec((Cout, K), lambda n: (0, 0)),
            pl.BlockSpec((Cout, 1), lambda n: (0, 0)),
        ],
        out_specs=out_spec,
        compiler_params=pltpu.CompilerParams(dimension_semantics=semantics),
    )(patch, w_mat, b_col)

    # (N, Cout, H*W) -> (N, Cout, H, W): free row-major reinterpretation (NCHW).
    return out_flat.reshape(N, Cout, H, W)


def _reference(x_nchw, w_oihw, bias):
    out = lax.conv_general_dilated(
        x_nchw, w_oihw,
        window_strides=(1, 1),
        padding=((1, 1), (1, 1)),
        dimension_numbers=("NCHW", "OIHW", "NCHW"),
    )
    out = out + bias.reshape(1, -1, 1, 1)
    return jnp.maximum(out, 0.0)


if __name__ == "__main__":
    # Small deterministic shapes consistent with single_conv(in_ch=4, out_ch=8).
    N, Cin, Cout, H, W = 2, 4, 8, 16, 16
    key = jax.random.PRNGKey(0)
    kx, kw, kb = jax.random.split(key, 3)

    x = jax.random.normal(kx, (N, Cin, H, W), dtype=jnp.float32)
    # Deterministic synthetic parameters (no checkpoint load).
    w = jax.random.normal(kw, (Cout, Cin, 3, 3), dtype=jnp.float32) * 0.1
    b = jax.random.normal(kb, (Cout,), dtype=jnp.float32) * 0.1

    fwd = jax.jit(single_conv_forward)
    out = jax.block_until_ready(fwd(x, w, b))
    ref = jax.block_until_ready(_reference(x, w, b))

    assert out.shape == (N, Cout, H, W), out.shape
    assert jnp.allclose(out, ref, atol=1e-4, rtol=1e-4), "mismatch vs reference conv"
    print("KERNEL_OK")
</pallas_src>

<mosaic_0001>
module attributes {stable_mosaic.version = 11 : i64} {
  func.func @conv3x3_relu_kernel(%arg0: i32, %arg1: memref<2x36x256xf32, #tpu.memory_space<vmem>>, %arg2: memref<8x36xf32, #tpu.memory_space<vmem>>, %arg3: memref<8x1xf32, #tpu.memory_space<vmem>>, %arg4: memref<2x8x256xf32, #tpu.memory_space<vmem>>) attributes {dimension_semantics = [#tpu.dimension_semantics<arbitrary>], iteration_bounds = array<i64: 1>, scalar_prefetch = 0 : i64, scratch_operands = 0 : i64, tpu.core_type = #tpu.core_type<tc>, window_params = [{pipeline_mode = #tpu.pipeline_mode<synchronous>, transform_indices = @transform_0, window_bounds = array<i64: 2, 36, 256>}, {pipeline_mode = #tpu.pipeline_mode<synchronous>, transform_indices = @transform_1, window_bounds = array<i64: 8, 36>}, {pipeline_mode = #tpu.pipeline_mode<synchronous>, transform_indices = @transform_2, window_bounds = array<i64: 8, 1>}, {pipeline_mode = #tpu.pipeline_mode<synchronous>, transform_indices = @transform_3, window_bounds = array<i64: 2, 8, 256>}]} {
    %c0 = arith.constant 0 : index
    %c0_0 = arith.constant 0 : index
    %0 = vector.load %arg2[%c0, %c0_0] : memref<8x36xf32, #tpu.memory_space<vmem>>, vector<8x36xf32>
    %c0_1 = arith.constant 0 : index
    %c0_2 = arith.constant 0 : index
    %1 = vector.load %arg3[%c0_1, %c0_2] : memref<8x1xf32, #tpu.memory_space<vmem>>, vector<8x1xf32>
    %c0_3 = arith.constant 0 : index
    %c0_4 = arith.constant 0 : index
    %c0_5 = arith.constant 0 : index
    %2 = vector.load %arg1[%c0_3, %c0_4, %c0_5] : memref<2x36x256xf32, #tpu.memory_space<vmem>>, vector<1x36x256xf32>
    %3 = vector.shape_cast %2 : vector<1x36x256xf32> to vector<36x256xf32>
    %cst = arith.constant dense<0.000000e+00> : vector<8x256xf32>
    %4 = tpu.matmul %0, %3, %cst {dimension_numbers = #tpu.dot_dimension_numbers<[1], [0], [0], [1], [0, 0, 1, 1], [], []>} : vector<8x36xf32>, vector<36x256xf32>, vector<8x256xf32> -> vector<8x256xf32>
    %5 = vector.broadcast %1 : vector<8x1xf32> to vector<8x256xf32>
    %6 = arith.addf %4, %5 : vector<8x256xf32>
    %cst_6 = arith.constant 0.000000e+00 : f32
    %7 = vector.broadcast %cst_6 : f32 to vector<8x256xf32>
    %8 = arith.maximumf %6, %7 : vector<8x256xf32>
    %c0_7 = arith.constant 0 : index
    %c0_8 = arith.constant 0 : index
    %c0_9 = arith.constant 0 : index
    %9 = vector.load %arg4[%c0_7, %c0_8, %c0_9] : memref<2x8x256xf32, #tpu.memory_space<vmem>>, vector<1x8x256xf32>
    %10 = vector.shape_cast %9 : vector<1x8x256xf32> to vector<8x256xf32>
    %11 = vector.shape_cast %8 : vector<8x256xf32> to vector<1x8x256xf32>
    tpu.vector_store %arg4[%c0_7, %c0_8, %c0_9], %11 {strides = array<i32>} : memref<2x8x256xf32, #tpu.memory_space<vmem>>, vector<1x8x256xf32>,
    %c1 = arith.constant 1 : index
    %c0_10 = arith.constant 0 : index
    %c0_11 = arith.constant 0 : index
    %12 = vector.load %arg1[%c1, %c0_10, %c0_11] : memref<2x36x256xf32, #tpu.memory_space<vmem>>, vector<1x36x256xf32>
    %13 = vector.shape_cast %12 : vector<1x36x256xf32> to vector<36x256xf32>
    %cst_12 = arith.constant dense<0.000000e+00> : vector<8x256xf32>
    %14 = tpu.matmul %0, %13, %cst_12 {dimension_numbers = #tpu.dot_dimension_numbers<[1], [0], [0], [1], [0, 0, 1, 1], [], []>} : vector<8x36xf32>, vector<36x256xf32>, vector<8x256xf32> -> vector<8x256xf32>
    %15 = vector.broadcast %1 : vector<8x1xf32> to vector<8x256xf32>
    %16 = arith.addf %14, %15 : vector<8x256xf32>
    %cst_13 = arith.constant 0.000000e+00 : f32
    %17 = vector.broadcast %cst_13 : f32 to vector<8x256xf32>
    %18 = arith.maximumf %16, %17 : vector<8x256xf32>
    %c1_14 = arith.constant 1 : index
    %c0_15 = arith.constant 0 : index
    %c0_16 = arith.constant 0 : index
    %19 = vector.load %arg4[%c1_14, %c0_15, %c0_16] : memref<2x8x256xf32, #tpu.memory_space<vmem>>, vector<1x8x256xf32>
    %20 = vector.shape_cast %19 : vector<1x8x256xf32> to vector<8x256xf32>
    %21 = vector.shape_cast %18 : vector<8x256xf32> to vector<1x8x256xf32>
    tpu.vector_store %arg4[%c1_14, %c0_15, %c0_16], %21 {strides = array<i32>} : memref<2x8x256xf32, #tpu.memory_space<vmem>>, vector<1x8x256xf32>,
    return
  }
  func.func @transform_0(%arg0: i32) -> (i32, i32, i32) {
    %c0_i32 = arith.constant 0 : i32
    %c0_i32_0 = arith.constant 0 : i32
    %c0_i32_1 = arith.constant 0 : i32
    %c0_i32_2 = arith.constant 0 : i32
    return %c0_i32, %c0_i32_0, %c0_i32_1 : i32, i32, i32
  }
  func.func @transform_1(%arg0: i32) -> (i32, i32) {
    %c0_i32 = arith.constant 0 : i32
    %c0_i32_0 = arith.constant 0 : i32
    %c0_i32_1 = arith.constant 0 : i32
    return %c0_i32, %c0_i32_0 : i32, i32
  }
  func.func @transform_2(%arg0: i32) -> (i32, i32) {
    %c0_i32 = arith.constant 0 : i32
    %c0_i32_0 = arith.constant 0 : i32
    %c0_i32_1 = arith.constant 0 : i32
    return %c0_i32, %c0_i32_0 : i32, i32
  }
  func.func @transform_3(%arg0: i32) -> (i32, i32, i32) {
    %c0_i32 = arith.constant 0 : i32
    %c0_i32_0 = arith.constant 0 : i32
    %c0_i32_1 = arith.constant 0 : i32
    %c0_i32_2 = arith.constant 0 : i32
    return %c0_i32, %c0_i32_0, %c0_i32_1 : i32, i32, i32
  }
}

</mosaic_0001>

<llo_original>
// kernel: single_conv_forward.1
$region0: #{single_conv_forward.1}
  #allocation0 [shape = 'u32[]', space=smem, size = 0x4, offset = 0x4, fixed_abs, tag = 'smem constant byte address 0x4 - core index']
  #allocation1 [shape = 'u32[144,128]{1,0:T(1,128)}', space=vmem, size = 0x12000, scoped, tag = 'internal scratch']
  %s0 = inlined_call_operand.vmem [shape: f32[2,36,256], index: 0, kind: input, shape index: {}]
  %s1 = inlined_call_operand.vmem [shape: f32[8,36], index: 1, kind: input, shape index: {}]
  %s2 = inlined_call_operand.vmem [shape: f32[8,1], index: 2, kind: input, shape index: {}]
  %s3 = inlined_call_operand.vmem [shape: f32[2,8,256], index: 3, kind: output, shape index: {}]
  %s4 = sld [smem:[#allocation0]]
  $region22: #{single_conv_forward.1} parent=0
    _
  %s6 = ssub.s32 1, %s4
  %s7 = scalar_select 0, %s6, %s4
  // Predicated region
  $region2: #{single_conv_forward.1} parent=0 // pred_check
    _
  $region3: #{single_conv_forward.1} parent=0 // pred_check_branch
    %9 = sbr.rel (0) target = $region5
  $region4: #{single_conv_forward.1} parent=0 // pred_region
    _
  $region5: #{single_conv_forward.1} parent=0 // pred_fallthru
    _
  // Predicated region
  $region6: #{single_conv_forward.1} parent=0 // pred_check
    _
  $region7: #{single_conv_forward.1} parent=0 // pred_check_branch
    %11 = sbr.rel (0) target = $region9
  $region8: #{single_conv_forward.1} parent=0 // pred_region
    _
  $region9: #{single_conv_forward.1} parent=0 // pred_fallthru
    _
  // Predicated region
  $region10: #{single_conv_forward.1} parent=0 // pred_check
    _
  $region11: #{single_conv_forward.1} parent=0 // pred_check_branch
    %13 = sbr.rel (0) target = $region13
  $region12: #{single_conv_forward.1} parent=0 // pred_region
    _
  $region13: #{single_conv_forward.1} parent=0 // pred_fallthru
    _
  %v14 = vld [vmem:[%s1] sm:$0xff]
  %v15 = vld [vmem:[%s2] sm:$0xff]
  %v16 = vld [vmem:[%s0] sm:$0xff]
  %v17 = vld [vmem:[%s0 + $0x8] sm:$0xff]
  %v18 = vld [vmem:[%s0 + $0x10] sm:$0xff]
  %v19 = vld [vmem:[%s0 + $0x18] sm:$0xff]
  %v20 = vld [vmem:[%s0 + $0x20] sm:$0xff]
  %v21 = vld [vmem:[%s0 + $0x28] sm:$0xff]
  %v22 = vld [vmem:[%s0 + $0x30] sm:$0xff]
  %v23 = vld [vmem:[%s0 + $0x38] sm:$0xff]
  %v24 = vld [vmem:[%s0 + $0x40] sm:$0xf]
  %v25 = vld [vmem:[%s0 + $0x48] sm:$0xf]
  %27 = vset.pattern.permute.xlu0 0
  %28 = vperm.xlu0 %27, %v15
  %v29 = vpop.permute.xlu0 %28
  %vm31 = vcmask 293888
  %v33 = vsel %vm31, %v14, 0
  %vm35 = vcmask 1043456
  %v37 = vsel %vm35, %v24, 0
  %v40 = vsel %vm35, %v25, 0
  %42 = vmatprep.subr.mxu0 %v17
  %43 = vmatpush1.msra.mxu0 %v16
  %44 = vmatprep.subr.mxu0 %v19
  %45 = vmatpush1.msra.mxu0 %v18
  %46 = vmatprep.subr.mxu0 %v21
  %47 = vmatpush1.msra.mxu0 %v20
  %48 = vmatprep.subr.mxu0 %v23
  %49 = vmatpush1.msra.mxu0 %v22
  %50 = vmatprep.subr.mxu0 %v40
  %51 = vmatpush1.msra.mxu0 %v37
  %52 = vmatprep.subr.mxu0 0.0
  %53 = vmatpush1.msra.mxu0 0.0
  %54 = vmatprep.subr.mxu0 0.0
  %55 = vmatpush1.msra.mxu0 0.0
  %56 = vmatprep.subr.mxu0 0.0
  %57 = vmatpush1.msra.mxu0 0.0
  %58 = vmatprep.subr.mxu0 0.0
  %59 = vmatpush1.msra.mxu0 0.0
  %60 = vmatprep.subr.mxu0 0.0
  %61 = vmatpush1.msra.mxu0 0.0
  %62 = vmatprep.subr.mxu0 0.0
  %63 = vmatpush1.msra.mxu0 0.0
  %64 = vmatprep.subr.mxu0 0.0
  %65 = vmatpush1.msra.mxu0 0.0
  %66 = vmatprep.subr.mxu0 0.0
  %67 = vmatpush1.msra.mxu0 0.0
  %68 = vmatprep.subr.mxu0 0.0
  %69 = vmatpush1.msra.mxu0 0.0
  %70 = vmatprep.subr.mxu0 0.0
  %71 = vmatpush1.msra.mxu0 0.0
  %72 = vmatprep.subr.mxu0 0.0
  %73 = vmatpush1.msra.mxu0 0.0
  %74 = vmatprep.subr.mxu0 0.0
  %75 = vmatpush1.msra.mxu0 0.0
  %76 = vmatprep.subr.mxu0 0.0
  %77 = vmatpush1.msra.mxu0 0.0
  %78 = vmatprep.subr.mxu0 0.0
  %79 = vmatpush1.msra.mxu0 0.0
  %80 = vmatprep.subr.mxu0 0.0
  %81 = vmatpush1.msra.mxu0 0.0
  %82 = vmatprep.subr.mxu0 0.0
  %83 = vmatpush1.msra.mxu0 0.0
  %84 = vmatprep.subr.mxu0 0.0
  %85 = vmatpush1.msra.mxu0 0.0
  %86 = vmatprep.subr.mxu0 0.0
  %87 = vmatpush1.msra.mxu0 0.0
  %88 = vmatprep.subr.mxu0 0.0
  %89 = vmatpush1.msra.mxu0 0.0
  %90 = vmatprep.subr.mxu0 0.0
  %91 = vmatpush1.msra.mxu0 0.0
  %92 = vmatprep.subr.mxu0 0.0
  %93 = vmatpush1.msra.mxu0 0.0
  %94 = vmatprep.subr.mxu0 0.0
  %95 = vmatpush1.msra.mxu0 0.0
  %96 = vmatprep.subr.mxu0 0.0
  %97 = vmatpush1.msra.mxu0 0.0
  %98 = vmatprep.subr.mxu0 0.0
  %99 = vmatpush1.msra.mxu0 0.0
  %100 = vmatprep.subr.mxu0 0.0
  %101 = vmatpush1.msra.mxu0 0.0
  %102 = vmatprep.subr.mxu0 0.0
  %103 = vmatpush1.msra.mxu0 0.0
  %104 = vmatprep.subr.mxu0 0.0
  %105 = vmatpush1.msra.mxu0 0.0
  %106 = vmatprep.mubr.f32.mxu0 0.0
  %107 = vmatmul.mubr.f32.gmra.mrb[0].mxu0 %v33
  %v108 = vpop.f32.mrb[0].mxu0
  %v109 = vadd.f32 %v29, %v108
  %v110 = vpop.f32.mrb[0].mxu0
  %v111 = vadd.f32 %v29, %v110
  %112 = vdwg.mxu0
  %v113 = vmax.f32 %v109, 0.0
  %v114 = vmax.f32 %v111, 0.0
  %115 = vst [vmem:[%s3] sm:$0xff] %v113
  %116 = vst [vmem:[%s3 + $0x8] sm:$0xff] %v114
  %s117 = scalar_lea.vmem %s0, 80
  %v118 = vld [vmem:[%s117] sm:$0xff]
  %v119 = vld [vmem:[%s117 + $0x8] sm:$0xff]
  %v120 = vld [vmem:[%s117 + $0x10] sm:$0xff]
  %v121 = vld [vmem:[%s117 + $0x18] sm:$0xff]
  %v122 = vld [vmem:[%s117 + $0x20] sm:$0xff]
  %v123 = vld [vmem:[%s117 + $0x28] sm:$0xff]
  %v124 = vld [vmem:[%s117 + $0x30] sm:$0xff]
  %v125 = vld [vmem:[%s117 + $0x38] sm:$0xff]
  %v126 = vld [vmem:[%s117 + $0x40] sm:$0xf]
  %v127 = vld [vmem:[%s117 + $0x48] sm:$0xf]
  %v129 = vsel %vm35, %v126, 0
  %v132 = vsel %vm35, %v127, 0
  %134 = vmatprep.subr.mxu0 %v119
  %135 = vmatpush1.msra.mxu0 %v118
  %136 = vmatprep.subr.mxu0 %v121
  %137 = vmatpush1.msra.mxu0 %v120
  %138 = vmatprep.subr.mxu0 %v123
  %139 = vmatpush1.msra.mxu0 %v122
  %140 = vmatprep.subr.mxu0 %v125
  %141 = vmatpush1.msra.mxu0 %v124
  %142 = vmatprep.subr.mxu0 %v132
  %143 = vmatpush1.msra.mxu0 %v129
  %144 = vmatprep.subr.mxu0 0.0
  %145 = vmatpush1.msra.mxu0 0.0
  %146 = vmatprep.subr.mxu0 0.0
  %147 = vmatpush1.msra.mxu0 0.0
  %148 = vmatprep.subr.mxu0 0.0
  %149 = vmatpush1.msra.mxu0 0.0
  %150 = vmatprep.subr.mxu0 0.0
  %151 = vmatpush1.msra.mxu0 0.0
  %152 = vmatprep.subr.mxu0 0.0
  %153 = vmatpush1.msra.mxu0 0.0
  %154 = vmatprep.subr.mxu0 0.0
  %155 = vmatpush1.msra.mxu0 0.0
  %156 = vmatprep.subr.mxu0 0.0
  %157 = vmatpush1.msra.mxu0 0.0
  %158 = vmatprep.subr.mxu0 0.0
  %159 = vmatpush1.msra.mxu0 0.0
  %160 = vmatprep.subr.mxu0 0.0
  %161 = vmatpush1.msra.mxu0 0.0
  %162 = vmatprep.subr.mxu0 0.0
  %163 = vmatpush1.msra.mxu0 0.0
  %164 = vmatprep.subr.mxu0 0.0
  %165 = vmatpush1.msra.mxu0 0.0
  %166 = vmatprep.subr.mxu0 0.0
  %167 = vmatpush1.msra.mxu0 0.0
  %168 = vmatprep.subr.mxu0 0.0
  %169 = vmatpush1.msra.mxu0 0.0
  %170 = vmatprep.subr.mxu0 0.0
  %171 = vmatpush1.msra.mxu0 0.0
  %172 = vmatprep.subr.mxu0 0.0
  %173 = vmatpush1.msra.mxu0 0.0
  %174 = vmatprep.subr.mxu0 0.0
  %175 = vmatpush1.msra.mxu0 0.0
  %176 = vmatprep.subr.mxu0 0.0
  %177 = vmatpush1.msra.mxu0 0.0
  %178 = vmatprep.subr.mxu0 0.0
  %179 = vmatpush1.msra.mxu0 0.0
  %180 = vmatprep.subr.mxu0 0.0
  %181 = vmatpush1.msra.mxu0 0.0
  %182 = vmatprep.subr.mxu0 0.0
  %183 = vmatpush1.msra.mxu0 0.0
  %184 = vmatprep.subr.mxu0 0.0
  %185 = vmatpush1.msra.mxu0 0.0
  %186 = vmatprep.subr.mxu0 0.0
  %187 = vmatpush1.msra.mxu0 0.0
  %188 = vmatprep.subr.mxu0 0.0
  %189 = vmatpush1.msra.mxu0 0.0
  %190 = vmatprep.subr.mxu0 0.0
  %191 = vmatpush1.msra.mxu0 0.0
  %192 = vmatprep.subr.mxu0 0.0
  %193 = vmatpush1.msra.mxu0 0.0
  %194 = vmatprep.subr.mxu0 0.0
  %195 = vmatpush1.msra.mxu0 0.0
  %196 = vmatprep.subr.mxu0 0.0
  %197 = vmatpush1.msra.mxu0 0.0
  %198 = vmatprep.mubr.f32.mxu0 0.0
  %199 = vmatmul.mubr.f32.gmra.mrb[0].mxu0 %v33
  %v200 = vpop.f32.mrb[0].mxu0
  %v201 = vadd.f32 %v29, %v200
  %v202 = vpop.f32.mrb[0].mxu0
  %v203 = vadd.f32 %v29, %v202
  %204 = vdwg.mxu0
  %v205 = vmax.f32 %v201, 0.0
  %v206 = vmax.f32 %v203, 0.0
  %s207 = scalar_lea.vmem %s3, 16
  %208 = vst [vmem:[%s207] sm:$0xff] %v205
  %209 = vst [vmem:[%s207 + $0x8] sm:$0xff] %v206
  // Predicated region
  $region14: #{single_conv_forward.1} parent=0 // pred_check
    _
  $region15: #{single_conv_forward.1} parent=0 // pred_check_branch
    %211 = sbr.rel (0) target = $region17
  $region16: #{single_conv_forward.1} parent=0 // pred_region
    _
  $region17: #{single_conv_forward.1} parent=0 // pred_fallthru
    _
  // Predicated region
  $region18: #{single_conv_forward.1} parent=0 // pred_check
    _
  $region19: #{single_conv_forward.1} parent=0 // pred_check_branch
    %213 = sbr.rel (0) target = $region21
  $region20: #{single_conv_forward.1} parent=0 // pred_region
    _
  $region21: #{single_conv_forward.1} parent=0 // pred_fallthru
    _

</llo_original>
